<compile_context>
chip_gen: v7x
topology: tpu7x:2x2x1
jax: 0.10.0
libtpu: 0.0.40
codegen_flags: <defaults>
</compile_context>

<pallas_src>
import math

import jax
import jax.numpy as jnp
from jax.experimental import pallas as pl
from jax.experimental.pallas import tpu as pltpu


def _cross_attn_kernel(x_ref, cond_ref, wv_ref, bv_ref, wo_ref, bo_ref, o_ref):
    # x_ref:    (1, C, TN)  NCHW with spatial flattened; N=H*W is the lane dim.
    # cond_ref: (1, E, 1)   conditioning (text+time) column for this batch.
    # wv_ref:   (E, C) value_projection weight stored (in, out); bv_ref: (1, C)
    # wo_ref:   (C, E) out_projection weight stored (out, in);   bo_ref: (C, 1)
    #
    # Softmax over a single key token == 1.0, so context == value and the
    # query/key path is output-dead (omitting it is bit-identical).
    cond = cond_ref[0].astype(jnp.float32)                                # (E, 1)

    # value = value_projection(cond): (E,C)*(E,1) -> sublane reduce -> (1, C)
    v = (jnp.sum(wv_ref[...].astype(jnp.float32) * cond, axis=0, keepdims=True)
         + bv_ref[...].astype(jnp.float32))                               # (1, C)

    # context column = out_projection(value): (C,E)*(1,E) -> lane reduce -> (C, 1)
    ctx = (jnp.sum(wo_ref[...].astype(jnp.float32) * v, axis=1, keepdims=True)
           + bo_ref[...].astype(jnp.float32))                             # (C, 1)

    # residual add; ctx broadcasts across the (lane-dense) spatial dimension.
    o_ref[0] = (x_ref[0] + ctx.astype(x_ref.dtype)).astype(o_ref.dtype)


def _pick_tile_n(n_total, c, itemsize, target_bytes=2 * 1024 * 1024):
    """Largest lane-aligned spatial tile whose (C, TN) slab stays ~target_bytes."""
    max_tn = max(128, (target_bytes // max(1, c * itemsize)) // 128 * 128)
    if n_total <= max_tn:
        return n_total                       # whole spatial extent in one tile
    for tn in range(max_tn, 127, -128):      # prefer an exact divisor (no ragged tail)
        if n_total % tn == 0:
            return tn
    return max_tn                            # ragged tail handled by block masking


def cross_attention_forward(x, text_embedding, time_embedding, params):
    """x: (B, C, H, W) NCHW like PyTorch. Returns (B, C, H, W)."""
    B, C, H, W = x.shape
    N = H * W
    E = params["wv"].shape[0]            # embedding_dim
    assert params["wv"].shape[1] == C    # query_dim == channels (module constraint)

    # --- glue (all free / tiny): NCHW -> (B, C, N) is a pure reshape, the
    # conditioning becomes an (E, 1) column per batch, and the out_projection
    # is re-oriented column-wise so the context lands as a (C, 1) column that
    # lane-broadcasts over the spatial dimension inside the kernel.
    x_flat = x.reshape(B, C, N)
    cond = (text_embedding + time_embedding).reshape(B, E, 1)
    wo_col = params["wo"].T              # (C, E)
    bo_col = params["bo"].T              # (C, 1)

    tn = _pick_tile_n(N, C, x.dtype.itemsize)
    grid = (B, pl.cdiv(N, tn))

    # Memory-bound: read x once, write out once, plus tiny weights/conditioning.
    cost = pl.CostEstimate(
        flops=int(B * N * C + 4 * B * grid[1] * E * C),
        transcendentals=0,
        bytes_accessed=int(2 * B * N * C * x.dtype.itemsize
                           + (2 * E * C + 2 * C) * 4 + B * E * 4),
    )

    full = lambda b, n: (0, 0)
    out_flat = pl.pallas_call(
        _cross_attn_kernel,
        out_shape=jax.ShapeDtypeStruct((B, C, N), x.dtype),
        grid=grid,
        in_specs=[
            pl.BlockSpec((1, C, tn), lambda b, n: (b, 0, n)),        # x tile
            pl.BlockSpec((1, E, 1), lambda b, n: (b, 0, 0)),         # conditioning
            pl.BlockSpec((E, C), full), pl.BlockSpec((1, C), full),  # Wv, bv
            pl.BlockSpec((C, E), full), pl.BlockSpec((C, 1), full),  # Wo^T, bo^T
        ],
        out_specs=pl.BlockSpec((1, C, tn), lambda b, n: (b, 0, n)),
        compiler_params=pltpu.CompilerParams(
            dimension_semantics=("parallel", "parallel"),
            vmem_limit_bytes=32 * 1024 * 1024),
        cost_estimate=cost,
    )(x_flat, cond, params["wv"], params["bv"], wo_col, bo_col)

    return out_flat.reshape(B, C, H, W)


def init_params(key, query_dim, embedding_dim, dtype=jnp.float32):
    """Deterministic synthetic parameters. Weights stored as (in, out).

    wq/bq/wk/bk are kept for module fidelity (and the full-path reference)
    but are output-dead and never shipped to the kernel.
    """
    ks = jax.random.split(key, 8)
    s = 0.05
    return {
        # query_projection: Linear(query_dim -> embedding_dim)   [output-dead]
        "wq": (s * jax.random.normal(ks[0], (query_dim, embedding_dim))).astype(dtype),
        "bq": (s * jax.random.normal(ks[1], (1, embedding_dim))).astype(dtype),
        # key_projection: Linear(embedding_dim -> embedding_dim) [output-dead]
        "wk": (s * jax.random.normal(ks[2], (embedding_dim, embedding_dim))).astype(dtype),
        "bk": (s * jax.random.normal(ks[3], (1, embedding_dim))).astype(dtype),
        # value_projection: Linear(embedding_dim -> query_dim)
        "wv": (s * jax.random.normal(ks[4], (embedding_dim, query_dim))).astype(dtype),
        "bv": (s * jax.random.normal(ks[5], (1, query_dim))).astype(dtype),
        # out_projection: Linear(embedding_dim -> query_dim)  (needs E == query_dim)
        "wo": (s * jax.random.normal(ks[6], (embedding_dim, query_dim))).astype(dtype),
        "bo": (s * jax.random.normal(ks[7], (1, query_dim))).astype(dtype),
    }


def _reference(x, text_embedding, time_embedding, params):
    """Pure-JAX transcription of the full PyTorch forward (incl. the dead
    q/k/softmax path) — verifies the kernel's simplification is exact."""
    B, C, H, W = x.shape
    N = H * W
    E = params["wq"].shape[1]
    cond = text_embedding + time_embedding                     # (B, E)
    q = jnp.transpose(x.reshape(B, C, N), (0, 2, 1))           # (B, N, C)
    q = q @ params["wq"] + params["bq"]                        # (B, N, E)
    k = (cond @ params["wk"] + params["bk"])[:, None, :]       # (B, 1, E)
    v = (cond @ params["wv"] + params["bv"])[:, None, :]       # (B, 1, C)
    scores = jnp.einsum("bne,bke->bnk", q, k) / math.sqrt(E)   # (B, N, 1)
    wts = jax.nn.softmax(scores, axis=-1)
    ctx = jnp.einsum("bnk,bkc->bnc", wts, v)                   # (B, N, C)
    out = ctx @ params["wo"] + params["bo"]                    # (B, N, C)
    out = jnp.transpose(out, (0, 2, 1)).reshape(B, C, H, W)
    return x + out


if __name__ == "__main__":
    # channels == query_dim == embedding_dim is required by the reference forward.
    B, C, H, W = 2, 32, 16, 16
    query_dim = C
    embedding_dim = 32

    key = jax.random.PRNGKey(0)
    k_x, k_txt, k_time, k_params = jax.random.split(key, 4)

    x = jax.random.normal(k_x, (B, C, H, W), dtype=jnp.float32)
    text_embedding = jax.random.normal(k_txt, (B, embedding_dim), dtype=jnp.float32)
    time_embedding = jax.random.normal(k_time, (B, embedding_dim), dtype=jnp.float32)
    params = init_params(k_params, query_dim, embedding_dim)

    out = cross_attention_forward(x, text_embedding, time_embedding, params)
    out = jax.block_until_ready(out)

    ref = _reference(x, text_embedding, time_embedding, params)
    assert out.shape == (B, C, H, W)
    assert jnp.allclose(out, ref, atol=1e-4, rtol=1e-4)

    print("KERNEL_OK")
</pallas_src>

<mosaic_0001>
module attributes {stable_mosaic.version = 11 : i64} {
  func.func @_cross_attn_kernel(%arg0: i32, %arg1: i32, %arg2: memref<1x32x256xf32, #tpu.memory_space<vmem>>, %arg3: memref<1x32x1xf32, #tpu.memory_space<vmem>>, %arg4: memref<32x32xf32, #tpu.memory_space<vmem>>, %arg5: memref<1x32xf32, #tpu.memory_space<vmem>>, %arg6: memref<32x32xf32, #tpu.memory_space<vmem>>, %arg7: memref<32x1xf32, #tpu.memory_space<vmem>>, %arg8: memref<1x32x256xf32, #tpu.memory_space<vmem>>) attributes {dimension_semantics = [#tpu.dimension_semantics<parallel>, #tpu.dimension_semantics<parallel>], iteration_bounds = array<i64: 2, 1>, scalar_prefetch = 0 : i64, scratch_operands = 0 : i64, tpu.core_type = #tpu.core_type<tc>, window_params = [{transform_indices = @transform_0, window_bounds = array<i64: 1, 32, 256>}, {transform_indices = @transform_1, window_bounds = array<i64: 1, 32, 1>}, {pipeline_mode = #tpu.pipeline_mode<synchronous>, transform_indices = @transform_2, window_bounds = array<i64: 32, 32>}, {pipeline_mode = #tpu.pipeline_mode<synchronous>, transform_indices = @transform_3, window_bounds = array<i64: 1, 32>}, {pipeline_mode = #tpu.pipeline_mode<synchronous>, transform_indices = @transform_4, window_bounds = array<i64: 32, 32>}, {pipeline_mode = #tpu.pipeline_mode<synchronous>, transform_indices = @transform_5, window_bounds = array<i64: 32, 1>}, {transform_indices = @transform_6, window_bounds = array<i64: 1, 32, 256>}]} {
    %c0 = arith.constant 0 : index
    %c0_0 = arith.constant 0 : index
    %c0_1 = arith.constant 0 : index
    %0 = vector.load %arg3[%c0, %c0_0, %c0_1] : memref<1x32x1xf32, #tpu.memory_space<vmem>>, vector<1x32x1xf32>
    %1 = vector.shape_cast %0 : vector<1x32x1xf32> to vector<32x1xf32>
    %c0_2 = arith.constant 0 : index
    %c0_3 = arith.constant 0 : index
    %2 = vector.load %arg4[%c0_2, %c0_3] : memref<32x32xf32, #tpu.memory_space<vmem>>, vector<32x32xf32>
    %3 = vector.broadcast %1 : vector<32x1xf32> to vector<32x32xf32>
    %4 = arith.mulf %2, %3 : vector<32x32xf32>
    %cst = arith.constant dense<0.000000e+00> : vector<32xf32>
    %5 = vector.multi_reduction <add>, %4, %cst [0] : vector<32x32xf32> to vector<32xf32>
    %6 = vector.shape_cast %5 : vector<32xf32> to vector<1x32xf32>
    %c0_4 = arith.constant 0 : index
    %c0_5 = arith.constant 0 : index
    %7 = vector.load %arg5[%c0_4, %c0_5] : memref<1x32xf32, #tpu.memory_space<vmem>>, vector<1x32xf32>
    %8 = arith.addf %6, %7 : vector<1x32xf32>
    %c0_6 = arith.constant 0 : index
    %c0_7 = arith.constant 0 : index
    %9 = vector.load %arg6[%c0_6, %c0_7] : memref<32x32xf32, #tpu.memory_space<vmem>>, vector<32x32xf32>
    %10 = vector.broadcast %8 : vector<1x32xf32> to vector<32x32xf32>
    %11 = arith.mulf %9, %10 : vector<32x32xf32>
    %cst_8 = arith.constant dense<0.000000e+00> : vector<32xf32>
    %12 = vector.multi_reduction <add>, %11, %cst_8 [1] : vector<32x32xf32> to vector<32xf32>
    %13 = vector.shape_cast %12 : vector<32xf32> to vector<32x1xf32>
    %c0_9 = arith.constant 0 : index
    %c0_10 = arith.constant 0 : index
    %14 = vector.load %arg7[%c0_9, %c0_10] : memref<32x1xf32, #tpu.memory_space<vmem>>, vector<32x1xf32>
    %15 = arith.addf %13, %14 : vector<32x1xf32>
    %c0_11 = arith.constant 0 : index
    %c0_12 = arith.constant 0 : index
    %c0_13 = arith.constant 0 : index
    %16 = vector.load %arg2[%c0_11, %c0_12, %c0_13] : memref<1x32x256xf32, #tpu.memory_space<vmem>>, vector<1x32x256xf32>
    %17 = vector.shape_cast %16 : vector<1x32x256xf32> to vector<32x256xf32>
    %18 = vector.broadcast %15 : vector<32x1xf32> to vector<32x256xf32>
    %19 = arith.addf %17, %18 : vector<32x256xf32>
    %c0_14 = arith.constant 0 : index
    %c0_15 = arith.constant 0 : index
    %c0_16 = arith.constant 0 : index
    %20 = vector.load %arg8[%c0_14, %c0_15, %c0_16] : memref<1x32x256xf32, #tpu.memory_space<vmem>>, vector<1x32x256xf32>
    %21 = vector.shape_cast %20 : vector<1x32x256xf32> to vector<32x256xf32>
    %22 = vector.shape_cast %19 : vector<32x256xf32> to vector<1x32x256xf32>
    tpu.vector_store %arg8[%c0_14, %c0_15, %c0_16], %22 {strides = array<i32>} : memref<1x32x256xf32, #tpu.memory_space<vmem>>, vector<1x32x256xf32>,
    return
  }
  func.func @transform_0(%arg0: i32, %arg1: i32) -> (i32, i32, i32) {
    %c0_i32 = arith.constant 0 : i32
    %c0_i32_0 = arith.constant 0 : i32
    return %arg0, %c0_i32, %arg1 : i32, i32, i32
  }
  func.func @transform_1(%arg0: i32, %arg1: i32) -> (i32, i32, i32) {
    %c0_i32 = arith.constant 0 : i32
    %c0_i32_0 = arith.constant 0 : i32
    %c0_i32_1 = arith.constant 0 : i32
    return %arg0, %c0_i32, %c0_i32_0 : i32, i32, i32
  }
  func.func @transform_2(%arg0: i32, %arg1: i32) -> (i32, i32) {
    %c0_i32 = arith.constant 0 : i32
    %c0_i32_0 = arith.constant 0 : i32
    %c0_i32_1 = arith.constant 0 : i32
    return %c0_i32, %c0_i32_0 : i32, i32
  }
  func.func @transform_3(%arg0: i32, %arg1: i32) -> (i32, i32) {
    %c0_i32 = arith.constant 0 : i32
    %c0_i32_0 = arith.constant 0 : i32
    %c0_i32_1 = arith.constant 0 : i32
    return %c0_i32, %c0_i32_0 : i32, i32
  }
  func.func @transform_4(%arg0: i32, %arg1: i32) -> (i32, i32) {
    %c0_i32 = arith.constant 0 : i32
    %c0_i32_0 = arith.constant 0 : i32
    %c0_i32_1 = arith.constant 0 : i32
    return %c0_i32, %c0_i32_0 : i32, i32
  }
  func.func @transform_5(%arg0: i32, %arg1: i32) -> (i32, i32) {
    %c0_i32 = arith.constant 0 : i32
    %c0_i32_0 = arith.constant 0 : i32
    %c0_i32_1 = arith.constant 0 : i32
    return %c0_i32, %c0_i32_0 : i32, i32
  }
  func.func @transform_6(%arg0: i32, %arg1: i32) -> (i32, i32, i32) {
    %c0_i32 = arith.constant 0 : i32
    %c0_i32_0 = arith.constant 0 : i32
    return %arg0, %c0_i32, %arg1 : i32, i32, i32
  }
}

</mosaic_0001>

<llo_original>
// kernel: tpu_custom_call.1
$region0: #{tpu_custom_call.1}
  #allocation0 [shape = 'u32[]', space=smem, size = 0x4, offset = 0x4, fixed_abs, tag = 'smem constant byte address 0x4 - core index']
  #allocation1 [shape = 'u32[144,128]{1,0:T(1,128)}', space=vmem, size = 0x12000, scoped, tag = 'internal scratch']
  %s0 = inlined_call_operand.hbm [shape: f32[2,32,256], index: 0, kind: input, shape index: {}]
  %s1 = inlined_call_operand.vmem [shape: f32[2,32,1], index: 1, kind: input, shape index: {}]
  %s2 = inlined_call_operand.vmem [shape: f32[32,32], index: 2, kind: input, shape index: {}]
  %s3 = inlined_call_operand.vmem [shape: f32[1,32], index: 3, kind: input, shape index: {}]
  %s4 = inlined_call_operand.vmem [shape: f32[32,32], index: 4, kind: input, shape index: {}]
  %s5 = inlined_call_operand.vmem [shape: f32[32,1], index: 5, kind: input, shape index: {}]
  %s6 = inlined_call_operand.hbm [shape: f32[2,32,256], index: 6, kind: output, shape index: {}]
  %s7 = sld [smem:[#allocation0]]
  $region61: #{tpu_custom_call.1} parent=0
    _
  %s9 = ssub.s32 1, %s7
  %s10 = scalar_select 0, %s9, %s7
  $region1: #{tpu_custom_call.1} parent=0
    #allocation2 [shape = 'u8[65536]{0}', space=vmem, size = 0x10000, scoped, tag = 'input window, operand 0']
    #allocation3 [shape = 's32[2]{0}', space=sflag, size = 0x8, scoped, tag = 'scoped memory for tpu_custom_call.1']
    #allocation4 [shape = 's32[2]{0}', space=sflag, size = 0x8, scoped, tag = 'scoped memory for tpu_custom_call.1']
    #allocation5 [shape = 'u8[65536]{0}', space=vmem, size = 0x10000, scoped, tag = 'output window, operand 0']
    %11 = vsyncpa [#allocation3], 0
    %s12 = scalar_lea.sflag [#allocation3], 1
    %13 = vsyncpa %s12, 0
    %14 = vsyncpa [#allocation4], 0
    %s15 = scalar_lea.sflag [#allocation4], 1
    %16 = vsyncpa %s15, 0
    loop: start=0, step=1, limit=4
    $region2: #{tpu_custom_call.1} parent=1 // loop_pre_header
      _
    $region3: #{tpu_custom_call.1} parent=1 // loop_header
      %s18 = sphi 0, %s22
      %p19 = scmp.ge.s32.totalorder %s18, 4
      %s25 = sphi 0, %s37
      %s26 = sphi 0, %s33
      %s27 = sphi 0, %s25
      %s28 = sphi 0, %s26
      %s29 = sphi 0, %s27
      %s30 = sphi 0, %s28
      %s42 = sphi 0, %s44
      %s45 = sphi 0, %s42
      %s46 = sphi 0, %s45
      %s62 = sphi 0, %s46
      %s68 = sphi 0, %s70
      %s71 = sphi 0, %s68
      %s72 = sphi 0, %s71
      %s88 = sphi 0, %s72
      %s92 = sphi 0, %s92
      %s94 = sphi 0, %s92
      %s95 = sphi 0, %s94
      %s109 = sphi 0, %s95
      %s113 = sphi 0, %s113
      %s115 = sphi 0, %s113
      %s116 = sphi 0, %s115
      %s130 = sphi 0, %s116
      %s134 = sphi 0, %s134
      %s136 = sphi 0, %s134
      %s137 = sphi 0, %s136
      %s151 = sphi 0, %s137
      %s155 = sphi 0, %s155
      %s157 = sphi 0, %s155
      %s158 = sphi 0, %s157
      %s172 = sphi 0, %s158
      %s180 = sphi 0, %s182
      %s183 = sphi 0, %s180
      %s184 = sphi 0, %s183
      %s200 = sphi 0, %s184
    $region4: #{tpu_custom_call.1} parent=1 // loop_header_branch
      %21 = sbr.rel (%p19) target = $region8
    $region5: #{tpu_custom_call.1} parent=1 // loop_body
      %s23 = ssub.s32 %s18, 1
      %s24 = ssub.s32 %s18, 2
      %s31 = sadd.s32 1, %s26
      %p32 = scmp.ge.s32.totalorder %s31, 1
      %s33 = scalar_select %p32, 0, %s31
      %s34 = sadd.s32 1, %s25
      %s35 = scalar_select %p32, %s34, %s25
      %p36 = scmp.ge.s32.totalorder %s35, 2
      %s37 = scalar_select %p36, 0, %s35
      %s38 = ssub.s32 %s25, %s37
      %s39 = ssub.s32 %s26, %s33
      %s40 = sor.u32 %s38, %s39
      %p41 = scmp.eq.s32.totalorder %s40, 0
      %s43 = sadd.s32 %s42, 1
      %s44 = scalar_select %p41, %s42, %s43
      %p47 = pneg %p41
      %p48 = scmp.eq.s32.totalorder %s18, 1
      %p49 = por %p47, %p48
      %p50 = scmp.ne.s32.totalorder %s42, %s45
      %p51 = scmp.eq.s32.totalorder %s18, 0
      %p52 = por %p50, %p51
      %p53 = scmp.ne.s32.totalorder %s42, %s45
      %p54 = scmp.eq.s32.totalorder %s23, 1
      %p55 = por %p53, %p54
      %p56 = scmp.ne.s32.totalorder %s45, %s46
      %p57 = scmp.eq.s32.totalorder %s23, 0
      %p58 = por %p56, %p57
      %p59 = scmp.ne.s32.totalorder %s45, %s46
      %p60 = scmp.eq.s32.totalorder %s24, 1
      %p61 = por %p59, %p60
      %p63 = scmp.ne.s32.totalorder %s46, %s62
      %p64 = scmp.eq.s32.totalorder %s24, 0
      %p65 = por %p63, %p64
      %s66 = ssub.s32 %s25, %s37
      %p67 = scmp.eq.s32.totalorder %s66, 0
      %s69 = sadd.s32 %s68, 1
      %s70 = scalar_select %p67, %s68, %s69
      %p73 = pneg %p67
      %p74 = scmp.eq.s32.totalorder %s18, 1
      %p75 = por %p73, %p74
      %p76 = scmp.ne.s32.totalorder %s68, %s71
      %p77 = scmp.eq.s32.totalorder %s18, 0
      %p78 = por %p76, %p77
      %p79 = scmp.ne.s32.totalorder %s68, %s71
      %p80 = scmp.eq.s32.totalorder %s23, 1
      %p81 = por %p79, %p80
      %p82 = scmp.ne.s32.totalorder %s71, %s72
      %p83 = scmp.eq.s32.totalorder %s23, 0
      %p84 = por %p82, %p83
      %p85 = scmp.ne.s32.totalorder %s71, %s72
      %p86 = scmp.eq.s32.totalorder %s24, 1
      %p87 = por %p85, %p86
      %p89 = scmp.ne.s32.totalorder %s72, %s88
      %p90 = scmp.eq.s32.totalorder %s24, 0
      %p91 = por %p89, %p90
      %s93 = sadd.s32 %s92, 1
      %p96 = scmp.eq.s32.totalorder %s18, 1
      %p97 = scmp.ne.s32.totalorder %s92, %s94
      %p98 = scmp.eq.s32.totalorder %s18, 0
      %p99 = por %p97, %p98
      %p100 = scmp.ne.s32.totalorder %s92, %s94
      %p101 = scmp.eq.s32.totalorder %s23, 1
      %p102 = por %p100, %p101
      %p103 = scmp.ne.s32.totalorder %s94, %s95
      %p104 = scmp.eq.s32.totalorder %s23, 0
      %p105 = por %p103, %p104
      %p106 = scmp.ne.s32.totalorder %s94, %s95
      %p107 = scmp.eq.s32.totalorder %s24, 1
      %p108 = por %p106, %p107
      %p110 = scmp.ne.s32.totalorder %s95, %s109
      %p111 = scmp.eq.s32.totalorder %s24, 0
      %p112 = por %p110, %p111
      %s114 = sadd.s32 %s113, 1
      %p117 = scmp.eq.s32.totalorder %s18, 1
      %p118 = scmp.ne.s32.totalorder %s113, %s115
      %p119 = scmp.eq.s32.totalorder %s18, 0
      %p120 = por %p118, %p119
      %p121 = scmp.ne.s32.totalorder %s113, %s115
      %p122 = scmp.eq.s32.totalorder %s23, 1
      %p123 = por %p121, %p122
      %p124 = scmp.ne.s32.totalorder %s115, %s116
      %p125 = scmp.eq.s32.totalorder %s23, 0
      %p126 = por %p124, %p125
      %p127 = scmp.ne.s32.totalorder %s115, %s116
      %p128 = scmp.eq.s32.totalorder %s24, 1
      %p129 = por %p127, %p128
      %p131 = scmp.ne.s32.totalorder %s116, %s130
      %p132 = scmp.eq.s32.totalorder %s24, 0
      %p133 = por %p131, %p132
      %s135 = sadd.s32 %s134, 1
      %p138 = scmp.eq.s32.totalorder %s18, 1
      %p139 = scmp.ne.s32.totalorder %s134, %s136
      %p140 = scmp.eq.s32.totalorder %s18, 0
      %p141 = por %p139, %p140
      %p142 = scmp.ne.s32.totalorder %s134, %s136
      %p143 = scmp.eq.s32.totalorder %s23, 1
      %p144 = por %p142, %p143
      %p145 = scmp.ne.s32.totalorder %s136, %s137
      %p146 = scmp.eq.s32.totalorder %s23, 0
      %p147 = por %p145, %p146
      %p148 = scmp.ne.s32.totalorder %s136, %s137
      %p149 = scmp.eq.s32.totalorder %s24, 1
      %p150 = por %p148, %p149
      %p152 = scmp.ne.s32.totalorder %s137, %s151
      %p153 = scmp.eq.s32.totalorder %s24, 0
      %p154 = por %p152, %p153
      %s156 = sadd.s32 %s155, 1
      %p159 = scmp.eq.s32.totalorder %s18, 1
      %p160 = scmp.ne.s32.totalorder %s155, %s157
      %p161 = scmp.eq.s32.totalorder %s18, 0
      %p162 = por %p160, %p161
      %p163 = scmp.ne.s32.totalorder %s155, %s157
      %p164 = scmp.eq.s32.totalorder %s23, 1
      %p165 = por %p163, %p164
      %p166 = scmp.ne.s32.totalorder %s157, %s158
      %p167 = scmp.eq.s32.totalorder %s23, 0
      %p168 = por %p166, %p167
      %p169 = scmp.ne.s32.totalorder %s157, %s158
      %p170 = scmp.eq.s32.totalorder %s24, 1
      %p171 = por %p169, %p170
      %p173 = scmp.ne.s32.totalorder %s158, %s172
      %p174 = scmp.eq.s32.totalorder %s24, 0
      %p175 = por %p173, %p174
      %s176 = ssub.s32 %s25, %s37
      %s177 = ssub.s32 %s26, %s33
      %s178 = sor.u32 %s176, %s177
      %p179 = scmp.eq.s32.totalorder %s178, 0
      %s181 = sadd.s32 %s180, 1
      %s182 = scalar_select %p179, %s180, %s181
      %p185 = pneg %p179
      %p186 = scmp.eq.s32.totalorder %s18, 1
      %p187 = por %p185, %p186
      %p188 = scmp.ne.s32.totalorder %s180, %s183
      %p189 = scmp.eq.s32.totalorder %s18, 0
      %p190 = por %p188, %p189
      %p191 = scmp.ne.s32.totalorder %s180, %s183
      %p192 = scmp.eq.s32.totalorder %s23, 1
      %p193 = por %p191, %p192
      %p194 = scmp.ne.s32.totalorder %s183, %s184
      %p195 = scmp.eq.s32.totalorder %s23, 0
      %p196 = por %p194, %p195
      %p197 = scmp.ne.s32.totalorder %s183, %s184
      %p198 = scmp.eq.s32.totalorder %s24, 1
      %p199 = por %p197, %p198
      %p201 = scmp.ne.s32.totalorder %s184, %s200
      %p202 = scmp.eq.s32.totalorder %s24, 0
      %p203 = por %p201, %p202
      %p204 = scmp.le.s32.totalorder 1, %s18
      %p205 = scmp.lt.s32.totalorder %s18, 3
      %p206 = pnand %p204, %p205
      %p207 = pneg %p206
      // Predicated region
      $region9: #{tpu_custom_call.1} parent=5 // pred_check
        _
      $region10: #{tpu_custom_call.1} parent=5 // pred_check_branch
        %209 = sbr.rel (%p206) target = $region12
      $region11: #{tpu_custom_call.1} parent=5 // pred_region
        %s210 = ssub.s32 %s18, 1
        // Predicated region
        $region13: #{tpu_custom_call.1} parent=11 // pred_check
          %p211 = pneg %p105
        $region14: #{tpu_custom_call.1} parent=11 // pred_check_branch
          %213 = sbr.rel (%p211) target = $region16
        $region15: #{tpu_custom_call.1} parent=11 // pred_region
          _
        $region16: #{tpu_custom_call.1} parent=11 // pred_fallthru
          _
        // Predicated region
        $region17: #{tpu_custom_call.1} parent=11 // pred_check
          %p214 = pneg %p126
        $region18: #{tpu_custom_call.1} parent=11 // pred_check_branch
          %216 = sbr.rel (%p214) target = $region20
        $region19: #{tpu_custom_call.1} parent=11 // pred_region
          _
        $region20: #{tpu_custom_call.1} parent=11 // pred_fallthru
          _
        // Predicated region
        $region21: #{tpu_custom_call.1} parent=11 // pred_check
          %p217 = pneg %p147
        $region22: #{tpu_custom_call.1} parent=11 // pred_check_branch
          %219 = sbr.rel (%p217) target = $region24
        $region23: #{tpu_custom_call.1} parent=11 // pred_region
          _
        $region24: #{tpu_custom_call.1} parent=11 // pred_fallthru
          _
        // Predicated region
        $region25: #{tpu_custom_call.1} parent=11 // pred_check
          %p220 = pneg %p168
        $region26: #{tpu_custom_call.1} parent=11 // pred_check_branch
          %222 = sbr.rel (%p220) target = $region28
        $region27: #{tpu_custom_call.1} parent=11 // pred_region
          _
        $region28: #{tpu_custom_call.1} parent=11 // pred_fallthru
          _
      $region12: #{tpu_custom_call.1} parent=5 // pred_fallthru
        _
      %p223 = scmp.lt.s32.totalorder %s18, 2
      // Predicated region
      $region29: #{tpu_custom_call.1} parent=5 // pred_check
        %p224 = pneg %p223
      $region30: #{tpu_custom_call.1} parent=5 // pred_check_branch
        %226 = sbr.rel (%p224) target = $region32
      $region31: #{tpu_custom_call.1} parent=5 // pred_region
        // Predicated region
        $region33: #{tpu_custom_call.1} parent=31 // pred_check
          %p227 = pneg %p52
        $region34: #{tpu_custom_call.1} parent=31 // pred_check_branch
          %229 = sbr.rel (%p227) target = $region36
        $region35: #{tpu_custom_call.1} parent=31 // pred_region
          %s230 = sand.u32 %s42, 1
          %s231 = scalar_lea.sflag [#allocation3], %s230
          %s232 = sand.u32 %s42, 1
          %s233 = smul.addr %s232, 64
          %s234 = scalar_lea.vmem [#allocation2], %s233
          %s235 = smul.u32 2, %s26
          %s237 = ssub.s32 1024, 1024
          %238 = vsyncadd %s231, %s237
          %s239 = smul.addr %s25, 8
          %s240 = sadd.s32 %s235, %s239
          %s241 = smul.addr %s240, 128
          %s242 = scalar_lea.hbm %s0, %s241
          %s243 = sshll.u32 %s234, 4
          %s244 = int_to_ptr.vmem [resolvable:$true] %s243
          %249 = dma.hbm_to_vmem [thread:$0]  %s242, 1024, %s244, %s231, 256, 256, 16
        $region36: #{tpu_custom_call.1} parent=31 // pred_fallthru
          _
        // Predicated region
        $region37: #{tpu_custom_call.1} parent=31 // pred_check
          %p250 = pneg %p78
        $region38: #{tpu_custom_call.1} parent=31 // pred_check_branch
          %252 = sbr.rel (%p250) target = $region40
        $region39: #{tpu_custom_call.1} parent=31 // pred_region
          %p253 = scmp.lt.s32.totalorder %s25, 1
          %s254 = scalar_select %p253, %s25, 1
          %s255 = smul.addr %s254, 4
          %s256 = smul.addr %s255, 8
          %s257 = scalar_lea.vmem %s1, %s256
        $region40: #{tpu_custom_call.1} parent=31 // pred_fallthru
          _
      $region32: #{tpu_custom_call.1} parent=5 // pred_fallthru
        _
      %p258 = scmp.le.s32.totalorder 1, %s18
      %p259 = scmp.lt.s32.totalorder %s18, 3
      %p260 = pnand %p258, %p259
      %p261 = pneg %p260
      // Predicated region
      $region41: #{tpu_custom_call.1} parent=5 // pred_check
        _
      $region42: #{tpu_custom_call.1} parent=5 // pred_check_branch
        %263 = sbr.rel (%p260) target = $region44
      $region43: #{tpu_custom_call.1} parent=5 // pred_region
        %s264 = ssub.s32 %s18, 1
        %s265 = sand.u32 %s45, 1
        %s266 = scalar_lea.sflag [#allocation3], %s265
        %s267 = sand.u32 %s45, 1
        %s268 = smul.addr %s267, 64
        %s269 = scalar_lea.vmem [#allocation2], %s268
        // Predicated region
        $region45: #{tpu_custom_call.1} parent=43 // pred_check
          %p270 = pneg %p58
        $region46: #{tpu_custom_call.1} parent=43 // pred_check_branch
          %272 = sbr.rel (%p270) target = $region48
        $region47: #{tpu_custom_call.1} parent=43 // pred_region
          %273 = dma.done %s266, 1024
        $region48: #{tpu_custom_call.1} parent=43 // pred_fallthru
          _
        %s274 = sand.u32 %s45, 1
        %s275 = scalar_lea.sflag [#allocation3], %s274
        %s276 = sand.u32 %s45, 1
        %s277 = smul.addr %s276, 64
        %s278 = scalar_lea.vmem [#allocation2], %s277
        %p279 = pneg %p58
        %p280 = pneg %p55
        %p281 = scmp.lt.s32.totalorder %s27, 1
        %s282 = scalar_select %p281, %s27, 1
        %s283 = smul.addr %s282, 4
        %s284 = smul.addr %s283, 8
        %s285 = scalar_lea.vmem %s1, %s284
        %p286 = pneg %p84
        %p287 = pneg %p81
        %p288 = pneg %p105
        %p289 = pneg %p102
        %p290 = pneg %p126
        %p291 = pneg %p123
        %p292 = pneg %p147
        %p293 = pneg %p144
        %p294 = pneg %p168
        %p295 = pneg %p165
        %p296 = pneg %p196
        %p297 = pneg %p193
        %s298 = sand.u32 %s183, 1
        %s299 = scalar_lea.sflag [#allocation4], %s298
        %s300 = sand.u32 %s183, 1
        %s301 = smul.addr %s300, 64
        %s302 = scalar_lea.vmem [#allocation5], %s301
        %s303 = smul.u32 2, %s28
        %p304 = scmp.lt.s32.totalorder %s27, 1
        %s305 = scalar_select %p304, %s27, 1
        %s306 = smul.addr %s305, 4
        %s307 = smul.addr %s306, 8
        %s308 = scalar_lea.vmem %s1, %s307
        %s309 = smul.u32 2, %s28
        %v310 = vld [vmem:[%s308] sm:$0xff]
        %v311 = vld [vmem:[%s308 + $0x8] sm:$0xff]
        %v312 = vld [vmem:[%s308 + $0x10] sm:$0xff]
        %v313 = vld [vmem:[%s308 + $0x18] sm:$0xff]
        %v314 = vld [vmem:[%s2] sm:$0xff]
        %v315 = vld [vmem:[%s2 + $0x8] sm:$0xff]
        %v316 = vld [vmem:[%s2 + $0x10] sm:$0xff]
        %v317 = vld [vmem:[%s2 + $0x18] sm:$0xff]
        %319 = vset.pattern.permute.xlu0 0
        %320 = vperm.xlu0 %319, %v310
        %v321 = vpop.permute.xlu0 %320
        %324 = vset.pattern.permute.xlu0 0
        %325 = vperm.xlu0 %324, %v311
        %v326 = vpop.permute.xlu0 %325
        %329 = vset.pattern.permute.xlu0 0
        %330 = vperm.xlu0 %329, %v312
        %v331 = vpop.permute.xlu0 %330
        %334 = vset.pattern.permute.xlu0 0
        %335 = vperm.xlu0 %334, %v313
        %v336 = vpop.permute.xlu0 %335
        %v338 = vmul.f32 %v314, %v321
        %v339 = vmul.f32 %v315, %v326
        %v340 = vmul.f32 %v316, %v331
        %v341 = vmul.f32 %v317, %v336
        %vm342 = vcmask 261120
        %v343 = vsel %vm342, %v338, 0.0
        %v344 = vsel %vm342, %v339, 0.0
        %v345 = vadd.f32 %v343, %v344
        %v346 = vsel %vm342, %v340, 0.0
        %v347 = vadd.f32 %v345, %v346
        %v348 = vsel %vm342, %v341, 0.0
        %v349 = vadd.f32 %v347, %v348
        %v350 = vrot.slane %v349, 4
        %v351 = vadd.f32 %v349, %v350
        %v352 = vrot.slane %v351, 2
        %v353 = vadd.f32 %v351, %v352
        %v354 = vrot.slane %v353, 1
        %v355 = vadd.f32 %v353, %v354
        %v356 = vld [vmem:[%s3] sm:$0x1]
        %v357 = vadd.f32 %v355, %v356
        %v358 = vld [vmem:[%s4] sm:$0xff]
        %v359 = vld [vmem:[%s4 + $0x8] sm:$0xff]
        %v360 = vld [vmem:[%s4 + $0x10] sm:$0xff]
        %v361 = vld [vmem:[%s4 + $0x18] sm:$0xff]
        %v362 = vlaneseq
        %v363 = vshrl.u32 %v362, 7
        %v364 = vsub.s32 0, %v363
        %v365 = vrot.slane %v357, %v364
        %v366 = vmul.f32 %v358, %v365
        %v367 = vmul.f32 %v359, %v365
        %v368 = vmul.f32 %v360, %v365
        %v369 = vmul.f32 %v361, %v365
        %v370 = vsel %vm342, %v366, 0.0
        %371 = vadd.xlane.f32.xlu0 %v370
        %v372 = vpop.xlane.xlu0 %371
        %v373 = vsel %vm342, %v367, 0.0
        %374 = vadd.xlane.f32.xlu0 %v373
        %v375 = vpop.xlane.xlu0 %374
        %v376 = vsel %vm342, %v368, 0.0
        %377 = vadd.xlane.f32.xlu0 %v376
        %v378 = vpop.xlane.xlu0 %377
        %v379 = vsel %vm342, %v369, 0.0
        %380 = vadd.xlane.f32.xlu0 %v379
        %v381 = vpop.xlane.xlu0 %380
        %v382 = vld [vmem:[%s5] sm:$0xff]
        %v383 = vld [vmem:[%s5 + $0x8] sm:$0xff]
        %v384 = vld [vmem:[%s5 + $0x10] sm:$0xff]
        %v385 = vld [vmem:[%s5 + $0x18] sm:$0xff]
        %v386 = vadd.f32 %v372, %v382
        %v387 = vadd.f32 %v375, %v383
        %v388 = vadd.f32 %v378, %v384
        %v389 = vadd.f32 %v381, %v385
        %v390 = vld [vmem:[%s269] sm:$0xff]
        %v391 = vld [vmem:[%s269 + $0x8] sm:$0xff]
        %v392 = vld [vmem:[%s269 + $0x10] sm:$0xff]
        %v393 = vld [vmem:[%s269 + $0x18] sm:$0xff]
        %v394 = vld [vmem:[%s269 + $0x20] sm:$0xff]
        %v395 = vld [vmem:[%s269 + $0x28] sm:$0xff]
        %v396 = vld [vmem:[%s269 + $0x30] sm:$0xff]
        %v397 = vld [vmem:[%s269 + $0x38] sm:$0xff]
        %399 = vset.pattern.permute.xlu0 0
        %400 = vperm.xlu0 %399, %v386
        %v401 = vpop.permute.xlu0 %400
        %404 = vset.pattern.permute.xlu0 0
        %405 = vperm.xlu0 %404, %v387
        %v406 = vpop.permute.xlu0 %405
        %409 = vset.pattern.permute.xlu0 0
        %410 = vperm.xlu0 %409, %v388
        %v411 = vpop.permute.xlu0 %410
        %414 = vset.pattern.permute.xlu0 0
        %415 = vperm.xlu0 %414, %v389
        %v416 = vpop.permute.xlu0 %415
        %v418 = vadd.f32 %v390, %v401
        %v419 = vadd.f32 %v391, %v401
        %v420 = vadd.f32 %v392, %v406
        %v421 = vadd.f32 %v393, %v406
        %v422 = vadd.f32 %v394, %v411
        %v423 = vadd.f32 %v395, %v411
        %v424 = vadd.f32 %v396, %v416
        %v425 = vadd.f32 %v397, %v416
        %426 = vst [vmem:[%s302] sm:$0xff] %v418
        %427 = vst [vmem:[%s302 + $0x8] sm:$0xff] %v419
        %428 = vst [vmem:[%s302 + $0x10] sm:$0xff] %v420
        %429 = vst [vmem:[%s302 + $0x18] sm:$0xff] %v421
        %430 = vst [vmem:[%s302 + $0x20] sm:$0xff] %v422
        %431 = vst [vmem:[%s302 + $0x28] sm:$0xff] %v423
        %432 = vst [vmem:[%s302 + $0x30] sm:$0xff] %v424
        %433 = vst [vmem:[%s302 + $0x38] sm:$0xff] %v425
        %s434 = sand.u32 %s183, 1
        %s435 = scalar_lea.sflag [#allocation4], %s434
        %s436 = sand.u32 %s183, 1
        %s437 = smul.addr %s436, 64
        %s438 = scalar_lea.vmem [#allocation5], %s437
        // Predicated region
        $region49: #{tpu_custom_call.1} parent=43 // pred_check
          %p439 = pneg %p193
        $region50: #{tpu_custom_call.1} parent=43 // pred_check_branch
          %441 = sbr.rel (%p439) target = $region52
        $region51: #{tpu_custom_call.1} parent=43 // pred_region
          %s442 = smul.u32 2, %s28
          %s444 = ssub.s32 1024, 1024
          %445 = vsyncadd %s435, %s444
          %s446 = smul.addr %s27, 8
          %s447 = sadd.s32 %s442, %s446
          %s448 = smul.addr %s447, 128
          %s449 = scalar_lea.hbm %s6, %s448
          %s450 = sshll.u32 %s438, 4
          %s451 = int_to_ptr.vmem [resolvable:$true] %s450
          %456 = dma.vmem_to_hbm [thread:$0]  %s451, 1024, %s449, %s435, 256, 256, 16
        $region52: #{tpu_custom_call.1} parent=43 // pred_fallthru
          _
      $region44: #{tpu_custom_call.1} parent=5 // pred_fallthru
        _
      %p457 = scmp.le.s32.totalorder 2, %s18
      // Predicated region
      $region53: #{tpu_custom_call.1} parent=5 // pred_check
        %p458 = pneg %p457
      $region54: #{tpu_custom_call.1} parent=5 // pred_check_branch
        %460 = sbr.rel (%p458) target = $region56
      $region55: #{tpu_custom_call.1} parent=5 // pred_region
        %s461 = ssub.s32 %s18, 2
        // Predicated region
        $region57: #{tpu_custom_call.1} parent=55 // pred_check
          %p462 = pneg %p199
        $region58: #{tpu_custom_call.1} parent=55 // pred_check_branch
          %464 = sbr.rel (%p462) target = $region60
        $region59: #{tpu_custom_call.1} parent=55 // pred_region
          %s465 = sand.u32 %s184, 1
          %s466 = scalar_lea.sflag [#allocation4], %s465
          %s467 = sand.u32 %s184, 1
          %s468 = smul.addr %s467, 64
          %s469 = scalar_lea.vmem [#allocation5], %s468
          %470 = dma.done %s466, 1024
        $region60: #{tpu_custom_call.1} parent=55 // pred_fallthru
          _
      $region56: #{tpu_custom_call.1} parent=5 // pred_fallthru
        _
    $region6: #{tpu_custom_call.1} parent=1 // loop_footer
      %s22 = sadd.s32 1, %s18
    $region7: #{tpu_custom_call.1} parent=1 // loop_footer_branch
      %17 = sbr.rel target = $region3
    $region8: #{tpu_custom_call.1} parent=1 // loop_exit
      _
    %471 = vsyncpa [#allocation3], 1
    %s472 = scalar_lea.sflag [#allocation3], 1
    %473 = vsyncpa %s472, 1
    %474 = vsyncpa [#allocation4], 1
    %s475 = scalar_lea.sflag [#allocation4], 1
    %476 = vsyncpa %s475, 1

</llo_original>
